<compile_context>
chip_gen: v5e
topology: v5e:2x2
jax: 0.10.0
libtpu: 0.0.40
codegen_flags: <defaults>
</compile_context>

<pallas_src>
import functools

import jax
import jax.numpy as jnp
from jax import lax
from jax.experimental import pallas as pl
from jax.experimental.pallas import tpu as pltpu

_LANE = 128
_EPS = 1e-8


def _round_up(n, m):
    return ((n + m - 1) // m) * m


def _corr_kernel(xr_ref, xc_ref, invr_ref, invc_ref, out_ref):
    """One (T, T) output tile of the cosine-similarity matrix.

    xr_ref  : (T, C)  row tile of x^T (points-major)   -> MXU LHS
    xc_ref  : (C, T)  column tile of x (channel-major) -> MXU RHS
    invr_ref: (T, 1)  per-point 1/max(||x_i||, eps) for the row tile
    invc_ref: (1, T)  per-point 1/max(||x_j||, eps) for the column tile
    out_ref : (T, T)
    """
    gram = jnp.dot(xr_ref[...], xc_ref[...], preferred_element_type=jnp.float32)
    cos = gram * invr_ref[...] * invc_ref[...]

    diag_block = pl.program_id(1) == pl.program_id(2)

    @pl.when(diag_block)
    def _():
        # Diagonal entries come from torch.eye and are never overwritten.
        ti, tj = out_ref.shape
        row = lax.broadcasted_iota(jnp.int32, (ti, tj), 0)
        col = lax.broadcasted_iota(jnp.int32, (ti, tj), 1)
        out_ref[...] = jnp.where(row == col, jnp.float32(1.0), cos).astype(out_ref.dtype)

    @pl.when(jnp.logical_not(diag_block))
    def _():
        out_ref[...] = cos.astype(out_ref.dtype)


@functools.partial(jax.jit, static_argnames=("max_tile",))
def correlation_forward(x, *, max_tile=512):
    """x: (B, C, P) -> (B, P, P) pairwise cosine similarity, diagonal = 1."""
    B, C, P = x.shape
    x = x.astype(jnp.float32)

    # Pad the point dim so output blocks are lane-dense multiples of 128 and
    # pick the largest tile <= max_tile that divides the padded extent.
    p_pad = _round_up(P, _LANE)
    tile = _LANE
    for t in (max_tile, 512, 256, 128):
        if t <= max_tile and t % _LANE == 0 and p_pad % t == 0:
            tile = t
            break
    if p_pad != P:
        x = jnp.pad(x, ((0, 0), (0, 0), (0, p_pad - P)))

    # Hoisted per-point inverse norms (O(B*P), plain XLA).  Padded points have
    # zero norm -> inv = 1/eps, but their gram entries are exactly 0.
    sumsq = jnp.sum(x * x, axis=1)                                  # (B, p_pad)
    inv = 1.0 / jnp.maximum(jnp.sqrt(sumsq), jnp.float32(_EPS))     # (B, p_pad)
    inv_row = inv[:, :, None]                                       # (B, p_pad, 1)
    inv_col = inv[:, None, :]                                       # (B, 1, p_pad)

    # Pre-transposed LHS so each grid step runs a plain (T,C) @ (C,T) matmul.
    x_rows = jnp.transpose(x, (0, 2, 1))                            # (B, p_pad, C)

    nt = p_pad // tile
    out = pl.pallas_call(
        _corr_kernel,
        out_shape=jax.ShapeDtypeStruct((B, p_pad, p_pad), jnp.float32),
        grid_spec=pltpu.PrefetchScalarGridSpec(
            num_scalar_prefetch=0,
            grid=(B, nt, nt),
            in_specs=[
                pl.BlockSpec((pl.Squeezed(), tile, C), lambda b, i, j: (b, i, 0)),
                pl.BlockSpec((pl.Squeezed(), C, tile), lambda b, i, j: (b, 0, j)),
                pl.BlockSpec((pl.Squeezed(), tile, 1), lambda b, i, j: (b, i, 0)),
                pl.BlockSpec((pl.Squeezed(), 1, tile), lambda b, i, j: (b, 0, j)),
            ],
            out_specs=pl.BlockSpec((pl.Squeezed(), tile, tile),
                                   lambda b, i, j: (b, i, j)),
        ),
        compiler_params=pltpu.CompilerParams(
            dimension_semantics=("parallel", "parallel", "parallel"),
            vmem_limit_bytes=32 * 1024 * 1024,
        ),
    )(x_rows, x, inv_row, inv_col)

    return out[:, :P, :P]


def init_unused_params(key, final_channel, encode_len):
    """Deterministic init of the module's Conv1d/BatchNorm1d parameters.

    Declared in __init__ but never touched by forward() (only by forward_b);
    created for shape fidelity and left unused.
    """
    c = final_channel
    corr_len = 2 * encode_len - 1
    k1, k2, k3 = jax.random.split(key, 3)
    return {
        "corr_bypass_conv_w": jax.random.normal(k1, (c, c, 3), jnp.float32) * 0.02,
        "corr_bypass_conv_b": jnp.zeros((c,), jnp.float32),
        "extra_1_conv_w": jax.random.normal(k2, (c, corr_len, 3), jnp.float32) * 0.02,
        "extra_1_conv_b": jnp.zeros((c,), jnp.float32),
        "extra_2_conv_w": jax.random.normal(k3, (c, 2 * c, 3), jnp.float32) * 0.02,
        "extra_2_conv_b": jnp.zeros((c,), jnp.float32),
        "bn_gamma": jnp.ones((3, c), jnp.float32),
        "bn_beta": jnp.zeros((3, c), jnp.float32),
    }


def _reference(x):
    """Plain-JAX reference: F.cosine_similarity semantics + eye diagonal."""
    gram = jnp.einsum("bci,bcj->bij", x, x)
    norms = jnp.maximum(jnp.sqrt(jnp.sum(x * x, axis=1)), jnp.float32(_EPS))  # (B, P)
    cos = gram / (norms[:, :, None] * norms[:, None, :])
    P = x.shape[-1]
    eye = jnp.eye(P, dtype=jnp.bool_)[None]
    return jnp.where(eye, jnp.float32(1.0), cos)


if __name__ == "__main__":
    key = jax.random.PRNGKey(0)
    kx, kp, kx2 = jax.random.split(key, 3)

    # Small shapes consistent with the module: batch=2, channels=4, points=16.
    B, C, P = 2, 4, 16
    x = jax.random.normal(kx, (B, C, P), dtype=jnp.float32)
    _params = init_unused_params(kp, final_channel=C, encode_len=P)

    out = jax.block_until_ready(correlation_forward(x))
    ref = _reference(x)
    assert out.shape == (B, P, P)
    assert jnp.allclose(out, ref, atol=1e-5, rtol=1e-5), "mismatch vs reference (P=16)"

    # Structural check of the multi-tile / padded path (P not a multiple of
    # 128 -> padding, 3x3 output blocks, off-diagonal pl.when branch).  Loose
    # tolerance keeps this robust to matmul-precision differences between the
    # XLA reference dot and the in-kernel MXU dot; tiling bugs give O(1) errors.
    B2, C2, P2 = 2, 4, 300
    x2 = jax.random.normal(kx2, (B2, C2, P2), dtype=jnp.float32)
    out2 = jax.block_until_ready(correlation_forward(x2))
    ref2 = _reference(x2)
    assert out2.shape == (B2, P2, P2)
    assert jnp.allclose(out2, ref2, atol=5e-2, rtol=5e-2), "mismatch vs reference (P=300)"

    print("KERNEL_OK")
</pallas_src>

<mosaic_0001>
module attributes {stable_mosaic.version = 11 : i64} {
  func.func @_corr_kernel(%arg0: i32, %arg1: i32, %arg2: i32, %arg3: memref<1x128x4xf32, #tpu.memory_space<vmem>>, %arg4: memref<1x4x128xf32, #tpu.memory_space<vmem>>, %arg5: memref<1x128x1xf32, #tpu.memory_space<vmem>>, %arg6: memref<1x1x128xf32, #tpu.memory_space<vmem>>, %arg7: memref<1x128x128xf32, #tpu.memory_space<vmem>>) attributes {dimension_semantics = [#tpu.dimension_semantics<parallel>, #tpu.dimension_semantics<parallel>, #tpu.dimension_semantics<parallel>], iteration_bounds = array<i64: 2, 1, 1>, scalar_prefetch = 0 : i64, scratch_operands = 0 : i64, tpu.core_type = #tpu.core_type<tc>, window_params = [{transform_indices = @transform_0, window_bounds = array<i64: 1, 128, 4>}, {transform_indices = @transform_1, window_bounds = array<i64: 1, 4, 128>}, {transform_indices = @transform_2, window_bounds = array<i64: 1, 128, 1>}, {transform_indices = @transform_3, window_bounds = array<i64: 1, 1, 128>}, {transform_indices = @transform_4, window_bounds = array<i64: 1, 128, 128>}]} {
    %c0 = arith.constant 0 : index
    %c0_0 = arith.constant 0 : index
    %c0_1 = arith.constant 0 : index
    %0 = vector.load %arg3[%c0, %c0_0, %c0_1] : memref<1x128x4xf32, #tpu.memory_space<vmem>>, vector<1x128x4xf32>
    %1 = vector.shape_cast %0 : vector<1x128x4xf32> to vector<128x4xf32>
    %c0_2 = arith.constant 0 : index
    %c0_3 = arith.constant 0 : index
    %c0_4 = arith.constant 0 : index
    %2 = vector.load %arg4[%c0_2, %c0_3, %c0_4] : memref<1x4x128xf32, #tpu.memory_space<vmem>>, vector<1x4x128xf32>
    %3 = vector.shape_cast %2 : vector<1x4x128xf32> to vector<4x128xf32>
    %cst = arith.constant dense<0.000000e+00> : vector<128x128xf32>
    %4 = tpu.matmul %1, %3, %cst {dimension_numbers = #tpu.dot_dimension_numbers<[1], [0], [0], [1], [0, 0, 1, 1], [], []>} : vector<128x4xf32>, vector<4x128xf32>, vector<128x128xf32> -> vector<128x128xf32>
    %c0_5 = arith.constant 0 : index
    %c0_6 = arith.constant 0 : index
    %c0_7 = arith.constant 0 : index
    %5 = vector.load %arg5[%c0_5, %c0_6, %c0_7] : memref<1x128x1xf32, #tpu.memory_space<vmem>>, vector<1x128x1xf32>
    %6 = vector.shape_cast %5 : vector<1x128x1xf32> to vector<128x1xf32>
    %7 = vector.broadcast %6 : vector<128x1xf32> to vector<128x128xf32>
    %8 = arith.mulf %4, %7 : vector<128x128xf32>
    %c0_8 = arith.constant 0 : index
    %c0_9 = arith.constant 0 : index
    %c0_10 = arith.constant 0 : index
    %9 = vector.load %arg6[%c0_8, %c0_9, %c0_10] : memref<1x1x128xf32, #tpu.memory_space<vmem>>, vector<1x1x128xf32>
    %10 = vector.shape_cast %9 : vector<1x1x128xf32> to vector<1x128xf32>
    %11 = vector.broadcast %10 : vector<1x128xf32> to vector<128x128xf32>
    %12 = arith.mulf %8, %11 : vector<128x128xf32>
    %13 = arith.cmpi eq, %arg1, %arg2 : i32
    %14 = arith.extui %13 : i1 to i32
    %c0_i32 = arith.constant 0 : i32
    %15 = arith.cmpi ne, %14, %c0_i32 : i32
    scf.if %15 {
      %19 = tpu.iota {dimensions = array<i32: 0>} : vector<128x128xi32>
      %20 = tpu.iota {dimensions = array<i32: 1>} : vector<128x128xi32>
      %21 = arith.cmpi eq, %19, %20 : vector<128x128xi32>
      %cst_12 = arith.constant 1.000000e+00 : f32
      %22 = vector.broadcast %cst_12 : f32 to vector<128x128xf32>
      %23 = arith.select %21, %22, %12 : vector<128x128xi1>, vector<128x128xf32>
      %c0_13 = arith.constant 0 : index
      %c0_14 = arith.constant 0 : index
      %c0_15 = arith.constant 0 : index
      %24 = vector.load %arg7[%c0_13, %c0_14, %c0_15] : memref<1x128x128xf32, #tpu.memory_space<vmem>>, vector<1x128x128xf32>
      %25 = vector.shape_cast %24 : vector<1x128x128xf32> to vector<128x128xf32>
      %26 = vector.shape_cast %23 : vector<128x128xf32> to vector<1x128x128xf32>
      tpu.vector_store %arg7[%c0_13, %c0_14, %c0_15], %26 {strides = array<i32>} : memref<1x128x128xf32, #tpu.memory_space<vmem>>, vector<1x128x128xf32>,
    } else {
    }
    %true = arith.constant true
    %16 = arith.xori %13, %true : i1
    %17 = arith.extui %16 : i1 to i32
    %c0_i32_11 = arith.constant 0 : i32
    %18 = arith.cmpi ne, %17, %c0_i32_11 : i32
    scf.if %18 {
      %c0_12 = arith.constant 0 : index
      %c0_13 = arith.constant 0 : index
      %c0_14 = arith.constant 0 : index
      %19 = vector.load %arg7[%c0_12, %c0_13, %c0_14] : memref<1x128x128xf32, #tpu.memory_space<vmem>>, vector<1x128x128xf32>
      %20 = vector.shape_cast %19 : vector<1x128x128xf32> to vector<128x128xf32>
      %21 = vector.shape_cast %12 : vector<128x128xf32> to vector<1x128x128xf32>
      tpu.vector_store %arg7[%c0_12, %c0_13, %c0_14], %21 {strides = array<i32>} : memref<1x128x128xf32, #tpu.memory_space<vmem>>, vector<1x128x128xf32>,
    } else {
    }
    return
  }
  func.func @transform_0(%arg0: i32, %arg1: i32, %arg2: i32) -> (i32, i32, i32) {
    %c0_i32 = arith.constant 0 : i32
    %c0_i32_0 = arith.constant 0 : i32
    return %arg0, %arg1, %c0_i32 : i32, i32, i32
  }
  func.func @transform_1(%arg0: i32, %arg1: i32, %arg2: i32) -> (i32, i32, i32) {
    %c0_i32 = arith.constant 0 : i32
    %c0_i32_0 = arith.constant 0 : i32
    return %arg0, %c0_i32, %arg2 : i32, i32, i32
  }
  func.func @transform_2(%arg0: i32, %arg1: i32, %arg2: i32) -> (i32, i32, i32) {
    %c0_i32 = arith.constant 0 : i32
    %c0_i32_0 = arith.constant 0 : i32
    return %arg0, %arg1, %c0_i32 : i32, i32, i32
  }
  func.func @transform_3(%arg0: i32, %arg1: i32, %arg2: i32) -> (i32, i32, i32) {
    %c0_i32 = arith.constant 0 : i32
    %c0_i32_0 = arith.constant 0 : i32
    return %arg0, %c0_i32, %arg2 : i32, i32, i32
  }
  func.func @transform_4(%arg0: i32, %arg1: i32, %arg2: i32) -> (i32, i32, i32) {
    %c0_i32 = arith.constant 0 : i32
    return %arg0, %arg1, %arg2 : i32, i32, i32
  }
}

</mosaic_0001>

<llo_original>
// kernel: correlation_forward.1
$region0: #{correlation_forward.1}
  #allocation0 [shape = 'u32[]', space=smem, size = 0x4, offset = 0x4, fixed_abs, tag = 'smem constant byte address 0x4 - core index']
  #allocation1 [shape = 'u32[72,128]{1,0:T(1,128)}', space=vmem, size = 0x9000, scoped, tag = 'internal scratch']
  %s0 = inlined_call_operand.vmem [shape: f32[2,128,4], index: 0, kind: input, shape index: {}]
  %s1 = inlined_call_operand.vmem [shape: f32[2,4,128], index: 1, kind: input, shape index: {}]
  %s2 = inlined_call_operand.vmem [shape: f32[2,128,1], index: 2, kind: input, shape index: {}]
  %s3 = inlined_call_operand.vmem [shape: f32[2,1,128], index: 3, kind: input, shape index: {}]
  %s4 = inlined_call_operand.vmem [shape: f32[2,128,128], index: 4, kind: output, shape index: {}]
  %s5 = sld [smem:[#allocation0]]
  $region57: #{correlation_forward.1} parent=0
    _
  %s7 = ssub.s32 1, %s5
  %s8 = scalar_select 0, %s7, %s5
  loop: start=0, step=1, limit=4
  $region2: #{correlation_forward.1} parent=0 // loop_pre_header
    _
  $region3: #{correlation_forward.1} parent=0 // loop_header
    %s10 = sphi 0, %s14
    %p11 = scmp.ge.s32.totalorder %s10, 4
    %s17 = sphi 0, %s36
    %s18 = sphi 0, %s32
    %s19 = sphi 0, %s28
    %s20 = sphi 0, %s17
    %s21 = sphi 0, %s18
    %s22 = sphi 0, %s19
    %s23 = sphi 0, %s20
    %s24 = sphi 0, %s21
    %s25 = sphi 0, %s22
    %s41 = sphi 0, %s43
    %s44 = sphi 0, %s41
    %s45 = sphi 0, %s44
    %s61 = sphi 0, %s45
    %s69 = sphi 0, %s71
    %s72 = sphi 0, %s69
    %s73 = sphi 0, %s72
    %s89 = sphi 0, %s73
    %s97 = sphi 0, %s99
    %s100 = sphi 0, %s97
    %s101 = sphi 0, %s100
    %s117 = sphi 0, %s101
    %s125 = sphi 0, %s127
    %s128 = sphi 0, %s125
    %s129 = sphi 0, %s128
    %s145 = sphi 0, %s129
    %s155 = sphi 0, %s157
    %s158 = sphi 0, %s155
    %s159 = sphi 0, %s158
    %s175 = sphi 0, %s159
  $region4: #{correlation_forward.1} parent=0 // loop_header_branch
    %13 = sbr.rel (%p11) target = $region8
  $region5: #{correlation_forward.1} parent=0 // loop_body
    %s15 = ssub.s32 %s10, 1
    %s16 = ssub.s32 %s10, 2
    %s26 = sadd.s32 1, %s19
    %p27 = scmp.ge.s32.totalorder %s26, 1
    %s28 = scalar_select %p27, 0, %s26
    %s29 = sadd.s32 1, %s18
    %s30 = scalar_select %p27, %s29, %s18
    %p31 = scmp.ge.s32.totalorder %s30, 1
    %s32 = scalar_select %p31, 0, %s30
    %s33 = sadd.s32 1, %s17
    %s34 = scalar_select %p31, %s33, %s17
    %p35 = scmp.ge.s32.totalorder %s34, 2
    %s36 = scalar_select %p35, 0, %s34
    %s37 = ssub.s32 %s17, %s36
    %s38 = ssub.s32 %s18, %s32
    %s39 = sor.u32 %s37, %s38
    %p40 = scmp.eq.s32.totalorder %s39, 0
    %s42 = sadd.s32 %s41, 1
    %s43 = scalar_select %p40, %s41, %s42
    %p46 = pneg %p40
    %p47 = scmp.eq.s32.totalorder %s10, 1
    %p48 = por %p46, %p47
    %p49 = scmp.ne.s32.totalorder %s41, %s44
    %p50 = scmp.eq.s32.totalorder %s10, 0
    %p51 = por %p49, %p50
    %p52 = scmp.ne.s32.totalorder %s41, %s44
    %p53 = scmp.eq.s32.totalorder %s15, 1
    %p54 = por %p52, %p53
    %p55 = scmp.ne.s32.totalorder %s44, %s45
    %p56 = scmp.eq.s32.totalorder %s15, 0
    %p57 = por %p55, %p56
    %p58 = scmp.ne.s32.totalorder %s44, %s45
    %p59 = scmp.eq.s32.totalorder %s16, 1
    %p60 = por %p58, %p59
    %p62 = scmp.ne.s32.totalorder %s45, %s61
    %p63 = scmp.eq.s32.totalorder %s16, 0
    %p64 = por %p62, %p63
    %s65 = ssub.s32 %s17, %s36
    %s66 = ssub.s32 %s19, %s28
    %s67 = sor.u32 %s65, %s66
    %p68 = scmp.eq.s32.totalorder %s67, 0
    %s70 = sadd.s32 %s69, 1
    %s71 = scalar_select %p68, %s69, %s70
    %p74 = pneg %p68
    %p75 = scmp.eq.s32.totalorder %s10, 1
    %p76 = por %p74, %p75
    %p77 = scmp.ne.s32.totalorder %s69, %s72
    %p78 = scmp.eq.s32.totalorder %s10, 0
    %p79 = por %p77, %p78
    %p80 = scmp.ne.s32.totalorder %s69, %s72
    %p81 = scmp.eq.s32.totalorder %s15, 1
    %p82 = por %p80, %p81
    %p83 = scmp.ne.s32.totalorder %s72, %s73
    %p84 = scmp.eq.s32.totalorder %s15, 0
    %p85 = por %p83, %p84
    %p86 = scmp.ne.s32.totalorder %s72, %s73
    %p87 = scmp.eq.s32.totalorder %s16, 1
    %p88 = por %p86, %p87
    %p90 = scmp.ne.s32.totalorder %s73, %s89
    %p91 = scmp.eq.s32.totalorder %s16, 0
    %p92 = por %p90, %p91
    %s93 = ssub.s32 %s17, %s36
    %s94 = ssub.s32 %s18, %s32
    %s95 = sor.u32 %s93, %s94
    %p96 = scmp.eq.s32.totalorder %s95, 0
    %s98 = sadd.s32 %s97, 1
    %s99 = scalar_select %p96, %s97, %s98
    %p102 = pneg %p96
    %p103 = scmp.eq.s32.totalorder %s10, 1
    %p104 = por %p102, %p103
    %p105 = scmp.ne.s32.totalorder %s97, %s100
    %p106 = scmp.eq.s32.totalorder %s10, 0
    %p107 = por %p105, %p106
    %p108 = scmp.ne.s32.totalorder %s97, %s100
    %p109 = scmp.eq.s32.totalorder %s15, 1
    %p110 = por %p108, %p109
    %p111 = scmp.ne.s32.totalorder %s100, %s101
    %p112 = scmp.eq.s32.totalorder %s15, 0
    %p113 = por %p111, %p112
    %p114 = scmp.ne.s32.totalorder %s100, %s101
    %p115 = scmp.eq.s32.totalorder %s16, 1
    %p116 = por %p114, %p115
    %p118 = scmp.ne.s32.totalorder %s101, %s117
    %p119 = scmp.eq.s32.totalorder %s16, 0
    %p120 = por %p118, %p119
    %s121 = ssub.s32 %s17, %s36
    %s122 = ssub.s32 %s19, %s28
    %s123 = sor.u32 %s121, %s122
    %p124 = scmp.eq.s32.totalorder %s123, 0
    %s126 = sadd.s32 %s125, 1
    %s127 = scalar_select %p124, %s125, %s126
    %p130 = pneg %p124
    %p131 = scmp.eq.s32.totalorder %s10, 1
    %p132 = por %p130, %p131
    %p133 = scmp.ne.s32.totalorder %s125, %s128
    %p134 = scmp.eq.s32.totalorder %s10, 0
    %p135 = por %p133, %p134
    %p136 = scmp.ne.s32.totalorder %s125, %s128
    %p137 = scmp.eq.s32.totalorder %s15, 1
    %p138 = por %p136, %p137
    %p139 = scmp.ne.s32.totalorder %s128, %s129
    %p140 = scmp.eq.s32.totalorder %s15, 0
    %p141 = por %p139, %p140
    %p142 = scmp.ne.s32.totalorder %s128, %s129
    %p143 = scmp.eq.s32.totalorder %s16, 1
    %p144 = por %p142, %p143
    %p146 = scmp.ne.s32.totalorder %s129, %s145
    %p147 = scmp.eq.s32.totalorder %s16, 0
    %p148 = por %p146, %p147
    %s149 = ssub.s32 %s17, %s36
    %s150 = ssub.s32 %s18, %s32
    %s151 = sor.u32 %s149, %s150
    %s152 = ssub.s32 %s19, %s28
    %s153 = sor.u32 %s151, %s152
    %p154 = scmp.eq.s32.totalorder %s153, 0
    %s156 = sadd.s32 %s155, 1
    %s157 = scalar_select %p154, %s155, %s156
    %p160 = pneg %p154
    %p161 = scmp.eq.s32.totalorder %s10, 1
    %p162 = por %p160, %p161
    %p163 = scmp.ne.s32.totalorder %s155, %s158
    %p164 = scmp.eq.s32.totalorder %s10, 0
    %p165 = por %p163, %p164
    %p166 = scmp.ne.s32.totalorder %s155, %s158
    %p167 = scmp.eq.s32.totalorder %s15, 1
    %p168 = por %p166, %p167
    %p169 = scmp.ne.s32.totalorder %s158, %s159
    %p170 = scmp.eq.s32.totalorder %s15, 0
    %p171 = por %p169, %p170
    %p172 = scmp.ne.s32.totalorder %s158, %s159
    %p173 = scmp.eq.s32.totalorder %s16, 1
    %p174 = por %p172, %p173
    %p176 = scmp.ne.s32.totalorder %s159, %s175
    %p177 = scmp.eq.s32.totalorder %s16, 0
    %p178 = por %p176, %p177
    %p179 = scmp.le.s32.totalorder 1, %s10
    %p180 = scmp.lt.s32.totalorder %s10, 3
    %p181 = pnand %p179, %p180
    %p182 = pneg %p181
    // Predicated region
    $region9: #{correlation_forward.1} parent=5 // pred_check
      _
    $region10: #{correlation_forward.1} parent=5 // pred_check_branch
      %184 = sbr.rel (%p181) target = $region12
    $region11: #{correlation_forward.1} parent=5 // pred_region
      %s185 = ssub.s32 %s10, 1
    $region12: #{correlation_forward.1} parent=5 // pred_fallthru
      _
    %p186 = scmp.lt.s32.totalorder %s10, 2
    // Predicated region
    $region13: #{correlation_forward.1} parent=5 // pred_check
      %p187 = pneg %p186
    $region14: #{correlation_forward.1} parent=5 // pred_check_branch
      %189 = sbr.rel (%p187) target = $region16
    $region15: #{correlation_forward.1} parent=5 // pred_region
      // Predicated region
      $region17: #{correlation_forward.1} parent=15 // pred_check
        %p190 = pneg %p51
      $region18: #{correlation_forward.1} parent=15 // pred_check_branch
        %192 = sbr.rel (%p190) target = $region20
      $region19: #{correlation_forward.1} parent=15 // pred_region
        %s193 = smul.u32 16, %s18
        %p194 = scmp.lt.s32.totalorder %s17, 1
        %s195 = scalar_select %p194, %s17, 1
        %p196 = scmp.lt.s32.totalorder %s193, 15
        %s197 = scalar_select %p196, %s193, 15
        %s198 = smul.addr %s195, 16
        %s199 = sadd.s32 %s197, %s198
        %s200 = smul.addr %s199, 8
        %s201 = scalar_lea.vmem %s0, %s200
        %s202 = smul.u32 16, %s18
      $region20: #{correlation_forward.1} parent=15 // pred_fallthru
        _
      // Predicated region
      $region21: #{correlation_forward.1} parent=15 // pred_check
        %p203 = pneg %p79
      $region22: #{correlation_forward.1} parent=15 // pred_check_branch
        %205 = sbr.rel (%p203) target = $region24
      $region23: #{correlation_forward.1} parent=15 // pred_region
        %p206 = scmp.lt.s32.totalorder %s17, 1
        %s207 = scalar_select %p206, %s17, 1
        %p208 = scmp.lt.s32.totalorder %s19, 0
        %s209 = scalar_select %p208, %s19, 0
        %s210 = sadd.s32 %s209, %s207
        %s211 = smul.addr %s210, 4
        %s212 = scalar_lea.vmem %s1, %s211
      $region24: #{correlation_forward.1} parent=15 // pred_fallthru
        _
      // Predicated region
      $region25: #{correlation_forward.1} parent=15 // pred_check
        %p213 = pneg %p107
      $region26: #{correlation_forward.1} parent=15 // pred_check_branch
        %215 = sbr.rel (%p213) target = $region28
      $region27: #{correlation_forward.1} parent=15 // pred_region
        %s216 = smul.u32 16, %s18
        %p217 = scmp.lt.s32.totalorder %s17, 1
        %s218 = scalar_select %p217, %s17, 1
        %p219 = scmp.lt.s32.totalorder %s216, 15
        %s220 = scalar_select %p219, %s216, 15
        %s221 = smul.addr %s218, 16
        %s222 = sadd.s32 %s220, %s221
        %s223 = smul.addr %s222, 8
        %s224 = scalar_lea.vmem %s2, %s223
        %s225 = smul.u32 16, %s18
      $region28: #{correlation_forward.1} parent=15 // pred_fallthru
        _
      // Predicated region
      $region29: #{correlation_forward.1} parent=15 // pred_check
        %p226 = pneg %p135
      $region30: #{correlation_forward.1} parent=15 // pred_check_branch
        %228 = sbr.rel (%p226) target = $region32
      $region31: #{correlation_forward.1} parent=15 // pred_region
        %p229 = scmp.lt.s32.totalorder %s17, 1
        %s230 = scalar_select %p229, %s17, 1
        %p231 = scmp.lt.s32.totalorder %s19, 0
        %s232 = scalar_select %p231, %s19, 0
        %s233 = sadd.s32 %s232, %s230
        %s234 = scalar_lea.vmem %s3, %s233
      $region32: #{correlation_forward.1} parent=15 // pred_fallthru
        _
    $region16: #{correlation_forward.1} parent=5 // pred_fallthru
      _
    %p235 = scmp.le.s32.totalorder 1, %s10
    %p236 = scmp.lt.s32.totalorder %s10, 3
    %p237 = pnand %p235, %p236
    %p238 = pneg %p237
    // Predicated region
    $region33: #{correlation_forward.1} parent=5 // pred_check
      _
    $region34: #{correlation_forward.1} parent=5 // pred_check_branch
      %240 = sbr.rel (%p237) target = $region36
    $region35: #{correlation_forward.1} parent=5 // pred_region
      %s241 = ssub.s32 %s10, 1
      %s242 = smul.u32 16, %s21
      %p243 = scmp.lt.s32.totalorder %s20, 1
      %s244 = scalar_select %p243, %s20, 1
      %p245 = scmp.lt.s32.totalorder %s242, 15
      %s246 = scalar_select %p245, %s242, 15
      %s247 = smul.addr %s244, 16
      %s248 = sadd.s32 %s246, %s247
      %s249 = smul.addr %s248, 8
      %s250 = scalar_lea.vmem %s0, %s249
      %p251 = pneg %p57
      %p252 = pneg %p54
      %p253 = scmp.lt.s32.totalorder %s20, 1
      %s254 = scalar_select %p253, %s20, 1
      %p255 = scmp.lt.s32.totalorder %s22, 0
      %s256 = scalar_select %p255, %s22, 0
      %s257 = sadd.s32 %s256, %s254
      %s258 = smul.addr %s257, 4
      %s259 = scalar_lea.vmem %s1, %s258
      %p260 = pneg %p85
      %p261 = pneg %p82
      %s262 = smul.u32 16, %s21
      %p263 = scmp.lt.s32.totalorder %s20, 1
      %s264 = scalar_select %p263, %s20, 1
      %p265 = scmp.lt.s32.totalorder %s262, 15
      %s266 = scalar_select %p265, %s262, 15
      %s267 = smul.addr %s264, 16
      %s268 = sadd.s32 %s266, %s267
      %s269 = smul.addr %s268, 8
      %s270 = scalar_lea.vmem %s2, %s269
      %p271 = pneg %p113
      %p272 = pneg %p110
      %p273 = scmp.lt.s32.totalorder %s20, 1
      %s274 = scalar_select %p273, %s20, 1
      %p275 = scmp.lt.s32.totalorder %s22, 0
      %s276 = scalar_select %p275, %s22, 0
      %s277 = sadd.s32 %s276, %s274
      %s278 = scalar_lea.vmem %s3, %s277
      %p279 = pneg %p141
      %p280 = pneg %p138
      %p281 = pneg %p171
      %p282 = pneg %p168
      %s283 = smul.u32 16, %s21
      %p284 = scmp.lt.s32.totalorder %s20, 1
      %s285 = scalar_select %p284, %s20, 1
      %p286 = scmp.lt.s32.totalorder %s283, 15
      %s287 = scalar_select %p286, %s283, 15
      %p288 = scmp.lt.s32.totalorder %s22, 0
      %s289 = scalar_select %p288, %s22, 0
      %s290 = sadd.s32 %s289, %s287
      %s291 = smul.addr %s285, 16
      %s292 = sadd.s32 %s290, %s291
      %s293 = smul.addr %s292, 8
      %s294 = scalar_lea.vmem %s4, %s293
      %s295 = smul.u32 16, %s21
      %p296 = scmp.lt.s32.totalorder %s20, 1
      %s297 = scalar_select %p296, %s20, 1
      %p298 = scmp.lt.s32.totalorder %s295, 15
      %s299 = scalar_select %p298, %s295, 15
      %s300 = smul.addr %s297, 16
      %s301 = sadd.s32 %s299, %s300
      %s302 = smul.addr %s301, 8
      %s303 = scalar_lea.vmem %s0, %s302
      %s304 = smul.u32 16, %s21
      %p305 = scmp.lt.s32.totalorder %s20, 1
      %s306 = scalar_select %p305, %s20, 1
      %p307 = scmp.lt.s32.totalorder %s22, 0
      %s308 = scalar_select %p307, %s22, 0
      %s309 = sadd.s32 %s308, %s306
      %s310 = smul.addr %s309, 4
      %s311 = scalar_lea.vmem %s1, %s310
      %s312 = smul.u32 16, %s21
      %p313 = scmp.lt.s32.totalorder %s20, 1
      %s314 = scalar_select %p313, %s20, 1
      %p315 = scmp.lt.s32.totalorder %s312, 15
      %s316 = scalar_select %p315, %s312, 15
      %s317 = smul.addr %s314, 16
      %s318 = sadd.s32 %s316, %s317
      %s319 = smul.addr %s318, 8
      %s320 = scalar_lea.vmem %s2, %s319
      %s321 = smul.u32 16, %s21
      %p322 = scmp.lt.s32.totalorder %s20, 1
      %s323 = scalar_select %p322, %s20, 1
      %p324 = scmp.lt.s32.totalorder %s22, 0
      %s325 = scalar_select %p324, %s22, 0
      %s326 = sadd.s32 %s325, %s323
      %s327 = scalar_lea.vmem %s3, %s326
      %s328 = smul.u32 16, %s21
      %p329 = scmp.lt.s32.totalorder %s20, 1
      %s330 = scalar_select %p329, %s20, 1
      %p331 = scmp.lt.s32.totalorder %s328, 15
      %s332 = scalar_select %p331, %s328, 15
      %p333 = scmp.lt.s32.totalorder %s22, 0
      %s334 = scalar_select %p333, %s22, 0
      %s335 = sadd.s32 %s334, %s332
      %s336 = smul.addr %s330, 16
      %s337 = sadd.s32 %s335, %s336
      %s338 = smul.addr %s337, 8
      %s339 = scalar_lea.vmem %s4, %s338
      %s340 = smul.u32 16, %s21
      %v341 = vld [vmem:[%s303] sm:$0xff]
      %v342 = vld [vmem:[%s303 + $0x8] sm:$0xff]
      %v343 = vld [vmem:[%s303 + $0x10] sm:$0xff]
      %v344 = vld [vmem:[%s303 + $0x18] sm:$0xff]
      %v345 = vld [vmem:[%s303 + $0x20] sm:$0xff]
      %v346 = vld [vmem:[%s303 + $0x28] sm:$0xff]
      %v347 = vld [vmem:[%s303 + $0x30] sm:$0xff]
      %v348 = vld [vmem:[%s303 + $0x38] sm:$0xff]
      %v349 = vld [vmem:[%s303 + $0x40] sm:$0xff]
      %v350 = vld [vmem:[%s303 + $0x48] sm:$0xff]
      %v351 = vld [vmem:[%s303 + $0x50] sm:$0xff]
      %v352 = vld [vmem:[%s303 + $0x58] sm:$0xff]
      %v353 = vld [vmem:[%s303 + $0x60] sm:$0xff]
      %v354 = vld [vmem:[%s303 + $0x68] sm:$0xff]
      %v355 = vld [vmem:[%s303 + $0x70] sm:$0xff]
      %v356 = vld [vmem:[%s303 + $0x78] sm:$0xff]
      %v357 = vld [vmem:[%s311] sm:$0xf]
      %vm358 = vcmask 31744
      %v360 = vsel %vm358, %v341, 0
      %v363 = vsel %vm358, %v342, 0
      %v366 = vsel %vm358, %v343, 0
      %v369 = vsel %vm358, %v344, 0
      %v372 = vsel %vm358, %v345, 0
      %v375 = vsel %vm358, %v346, 0
      %v378 = vsel %vm358, %v347, 0
      %v381 = vsel %vm358, %v348, 0
      %v384 = vsel %vm358, %v349, 0
      %v387 = vsel %vm358, %v350, 0
      %v390 = vsel %vm358, %v351, 0
      %v393 = vsel %vm358, %v352, 0
      %v396 = vsel %vm358, %v353, 0
      %v399 = vsel %vm358, %v354, 0
      %v402 = vsel %vm358, %v355, 0
      %v405 = vsel %vm358, %v356, 0
      %vm407 = vcmask 1043456
      %v409 = vsel %vm407, %v357, 0
      %411 = vmatpush.msra.mxu0 0.0
      %412 = vmatpush.msra.mxu0 0.0
      %413 = vmatpush.msra.mxu0 0.0
      %414 = vmatpush.msra.mxu0 0.0
      %415 = vmatpush.msra.mxu0 0.0
      %416 = vmatpush.msra.mxu0 0.0
      %417 = vmatpush.msra.mxu0 0.0
      %418 = vmatpush.msra.mxu0 0.0
      %419 = vmatpush.msra.mxu0 0.0
      %420 = vmatpush.msra.mxu0 0.0
      %421 = vmatpush.msra.mxu0 0.0
      %422 = vmatpush.msra.mxu0 0.0
      %423 = vmatpush.msra.mxu0 0.0
      %424 = vmatpush.msra.mxu0 0.0
      %425 = vmatpush.msra.mxu0 0.0
      %426 = vmatpush.msra.mxu0 %v409
      %427 = vmatmul.f32.gmra.mxu0 %v360
      %v428 = vpop.f32.mrf.mxu0
      %v429 = vadd.f32 0.0, %v428
      %430 = vmatmul.f32.gmra.mxu0 %v363
      %v431 = vpop.f32.mrf.mxu0
      %v432 = vadd.f32 0.0, %v431
      %433 = vmatmul.f32.gmra.mxu0 %v366
      %v434 = vpop.f32.mrf.mxu0
      %v435 = vadd.f32 0.0, %v434
      %436 = vmatmul.f32.gmra.mxu0 %v369
      %v437 = vpop.f32.mrf.mxu0
      %v438 = vadd.f32 0.0, %v437
      %439 = vmatmul.f32.gmra.mxu0 %v372
      %v440 = vpop.f32.mrf.mxu0
      %v441 = vadd.f32 0.0, %v440
      %442 = vmatmul.f32.gmra.mxu0 %v375
      %v443 = vpop.f32.mrf.mxu0
      %v444 = vadd.f32 0.0, %v443
      %445 = vmatmul.f32.gmra.mxu0 %v378
      %v446 = vpop.f32.mrf.mxu0
      %v447 = vadd.f32 0.0, %v446
      %448 = vmatmul.f32.gmra.mxu0 %v381
      %v449 = vpop.f32.mrf.mxu0
      %v450 = vadd.f32 0.0, %v449
      %451 = vmatmul.f32.gmra.mxu0 %v384
      %v452 = vpop.f32.mrf.mxu0
      %v453 = vadd.f32 0.0, %v452
      %454 = vmatmul.f32.gmra.mxu0 %v387
      %v455 = vpop.f32.mrf.mxu0
      %v456 = vadd.f32 0.0, %v455
      %457 = vmatmul.f32.gmra.mxu0 %v390
      %v458 = vpop.f32.mrf.mxu0
      %v459 = vadd.f32 0.0, %v458
      %460 = vmatmul.f32.gmra.mxu0 %v393
      %v461 = vpop.f32.mrf.mxu0
      %v462 = vadd.f32 0.0, %v461
      %463 = vmatmul.f32.gmra.mxu0 %v396
      %v464 = vpop.f32.mrf.mxu0
      %v465 = vadd.f32 0.0, %v464
      %466 = vmatmul.f32.gmra.mxu0 %v399
      %v467 = vpop.f32.mrf.mxu0
      %v468 = vadd.f32 0.0, %v467
      %469 = vmatmul.f32.gmra.mxu0 %v402
      %v470 = vpop.f32.mrf.mxu0
      %v471 = vadd.f32 0.0, %v470
      %472 = vmatmul.f32.gmra.mxu0 %v405
      %v473 = vpop.f32.mrf.mxu0
      %v474 = vadd.f32 0.0, %v473
      %475 = vdwg.mxu0
      %v476 = vld [vmem:[%s320] sm:$0xff]
      %v477 = vld [vmem:[%s320 + $0x8] sm:$0xff]
      %v478 = vld [vmem:[%s320 + $0x10] sm:$0xff]
      %v479 = vld [vmem:[%s320 + $0x18] sm:$0xff]
      %v480 = vld [vmem:[%s320 + $0x20] sm:$0xff]
      %v481 = vld [vmem:[%s320 + $0x28] sm:$0xff]
      %v482 = vld [vmem:[%s320 + $0x30] sm:$0xff]
      %v483 = vld [vmem:[%s320 + $0x38] sm:$0xff]
      %v484 = vld [vmem:[%s320 + $0x40] sm:$0xff]
      %v485 = vld [vmem:[%s320 + $0x48] sm:$0xff]
      %v486 = vld [vmem:[%s320 + $0x50] sm:$0xff]
      %v487 = vld [vmem:[%s320 + $0x58] sm:$0xff]
      %v488 = vld [vmem:[%s320 + $0x60] sm:$0xff]
      %v489 = vld [vmem:[%s320 + $0x68] sm:$0xff]
      %v490 = vld [vmem:[%s320 + $0x70] sm:$0xff]
      %v491 = vld [vmem:[%s320 + $0x78] sm:$0xff]
      %493 = vset.pattern.permute.xlu0 0
      %494 = vperm.xlu0 %493, %v476
      %v495 = vpop.permute.xlu0 %494
      %498 = vset.pattern.permute.xlu0 0
      %499 = vperm.xlu0 %498, %v477
      %v500 = vpop.permute.xlu0 %499
      %503 = vset.pattern.permute.xlu0 0
      %504 = vperm.xlu0 %503, %v478
      %v505 = vpop.permute.xlu0 %504
      %508 = vset.pattern.permute.xlu0 0
      %509 = vperm.xlu0 %508, %v479
      %v510 = vpop.permute.xlu0 %509
      %513 = vset.pattern.permute.xlu0 0
      %514 = vperm.xlu0 %513, %v480
      %v515 = vpop.permute.xlu0 %514
      %518 = vset.pattern.permute.xlu0 0
      %519 = vperm.xlu0 %518, %v481
      %v520 = vpop.permute.xlu0 %519
      %523 = vset.pattern.permute.xlu0 0
      %524 = vperm.xlu0 %523, %v482
      %v525 = vpop.permute.xlu0 %524
      %528 = vset.pattern.permute.xlu0 0
      %529 = vperm.xlu0 %528, %v483
      %v530 = vpop.permute.xlu0 %529
      %533 = vset.pattern.permute.xlu0 0
      %534 = vperm.xlu0 %533, %v484
      %v535 = vpop.permute.xlu0 %534
      %538 = vset.pattern.permute.xlu0 0
      %539 = vperm.xlu0 %538, %v485
      %v540 = vpop.permute.xlu0 %539
      %543 = vset.pattern.permute.xlu0 0
      %544 = vperm.xlu0 %543, %v486
      %v545 = vpop.permute.xlu0 %544
      %548 = vset.pattern.permute.xlu0 0
      %549 = vperm.xlu0 %548, %v487
      %v550 = vpop.permute.xlu0 %549
      %553 = vset.pattern.permute.xlu0 0
      %554 = vperm.xlu0 %553, %v488
      %v555 = vpop.permute.xlu0 %554
      %558 = vset.pattern.permute.xlu0 0
      %559 = vperm.xlu0 %558, %v489
      %v560 = vpop.permute.xlu0 %559
      %563 = vset.pattern.permute.xlu0 0
      %564 = vperm.xlu0 %563, %v490
      %v565 = vpop.permute.xlu0 %564
      %568 = vset.pattern.permute.xlu0 0
      %569 = vperm.xlu0 %568, %v491
      %v570 = vpop.permute.xlu0 %569
      %v572 = vmul.f32 %v429, %v495
      %v573 = vmul.f32 %v432, %v500
      %v574 = vmul.f32 %v435, %v505
      %v575 = vmul.f32 %v438, %v510
      %v576 = vmul.f32 %v441, %v515
      %v577 = vmul.f32 %v444, %v520
      %v578 = vmul.f32 %v447, %v525
      %v579 = vmul.f32 %v450, %v530
      %v580 = vmul.f32 %v453, %v535
      %v581 = vmul.f32 %v456, %v540
      %v582 = vmul.f32 %v459, %v545
      %v583 = vmul.f32 %v462, %v550
      %v584 = vmul.f32 %v465, %v555
      %v585 = vmul.f32 %v468, %v560
      %v586 = vmul.f32 %v471, %v565
      %v587 = vmul.f32 %v474, %v570
      %v588 = vld [vmem:[%s327] sm:$0x1]
      %v590 = vperm.slane %v588, 0
      %v592 = vmul.f32 %v572, %v590
      %v593 = vmul.f32 %v573, %v590
      %v594 = vmul.f32 %v574, %v590
      %v595 = vmul.f32 %v575, %v590
      %v596 = vmul.f32 %v576, %v590
      %v597 = vmul.f32 %v577, %v590
      %v598 = vmul.f32 %v578, %v590
      %v599 = vmul.f32 %v579, %v590
      %v600 = vmul.f32 %v580, %v590
      %v601 = vmul.f32 %v581, %v590
      %v602 = vmul.f32 %v582, %v590
      %v603 = vmul.f32 %v583, %v590
      %v604 = vmul.f32 %v584, %v590
      %v605 = vmul.f32 %v585, %v590
      %v606 = vmul.f32 %v586, %v590
      %v607 = vmul.f32 %v587, %v590
      %p608 = scmp.eq.s32.totalorder %s21, %s22
      // Predicated region
      $region37: #{correlation_forward.1} parent=35 // pred_check
        %p609 = pneg %p608
      $region38: #{correlation_forward.1} parent=35 // pred_check_branch
        %611 = sbr.rel (%p609) target = $region40
      $region39: #{correlation_forward.1} parent=35 // pred_region
        %v612 = vlaneseq
        %v613 = vshrl.u32 %v612, 7
        %v614 = vadd.s32 %v613, 8
        %v615 = vadd.s32 %v613, 16
        %v616 = vadd.s32 %v613, 24
        %v617 = vadd.s32 %v613, 32
        %v618 = vadd.s32 %v613, 40
        %v619 = vadd.s32 %v613, 48
        %v620 = vadd.s32 %v613, 56
        %v621 = vadd.s32 %v613, 64
        %v622 = vadd.s32 %v613, 72
        %v623 = vadd.s32 %v613, 80
        %v624 = vadd.s32 %v613, 88
        %v625 = vadd.s32 %v613, 96
        %v626 = vadd.s32 %v613, 104
        %v627 = vadd.s32 %v613, 112
        %v628 = vadd.s32 %v613, 120
        %v629 = vlaneseq
        %v630 = vand.u32 %v629, 127
        %vm631 = vcmp.eq.s32.totalorder %v613, %v630
        %vm632 = vcmp.eq.s32.totalorder %v614, %v630
        %vm633 = vcmp.eq.s32.totalorder %v615, %v630
        %vm634 = vcmp.eq.s32.totalorder %v616, %v630
        %vm635 = vcmp.eq.s32.totalorder %v617, %v630
        %vm636 = vcmp.eq.s32.totalorder %v618, %v630
        %vm637 = vcmp.eq.s32.totalorder %v619, %v630
        %vm638 = vcmp.eq.s32.totalorder %v620, %v630
        %vm639 = vcmp.eq.s32.totalorder %v621, %v630
        %vm640 = vcmp.eq.s32.totalorder %v622, %v630
        %vm641 = vcmp.eq.s32.totalorder %v623, %v630
        %vm642 = vcmp.eq.s32.totalorder %v624, %v630
        %vm643 = vcmp.eq.s32.totalorder %v625, %v630
        %vm644 = vcmp.eq.s32.totalorder %v626, %v630
        %vm645 = vcmp.eq.s32.totalorder %v627, %v630
        %vm646 = vcmp.eq.s32.totalorder %v628, %v630
        %v647 = vsel %vm631, 1.0, %v592
        %v648 = vsel %vm632, 1.0, %v593
        %v649 = vsel %vm633, 1.0, %v594
        %v650 = vsel %vm634, 1.0, %v595
        %v651 = vsel %vm635, 1.0, %v596
        %v652 = vsel %vm636, 1.0, %v597
        %v653 = vsel %vm637, 1.0, %v598
        %v654 = vsel %vm638, 1.0, %v599
        %v655 = vsel %vm639, 1.0, %v600
        %v656 = vsel %vm640, 1.0, %v601
        %v657 = vsel %vm641, 1.0, %v602
        %v658 = vsel %vm642, 1.0, %v603
        %v659 = vsel %vm643, 1.0, %v604
        %v660 = vsel %vm644, 1.0, %v605
        %v661 = vsel %vm645, 1.0, %v606
        %v662 = vsel %vm646, 1.0, %v607
        %663 = vst [vmem:[%s339] sm:$0xff] %v647
        %664 = vst [vmem:[%s339 + $0x8] sm:$0xff] %v648
        %665 = vst [vmem:[%s339 + $0x10] sm:$0xff] %v649
        %666 = vst [vmem:[%s339 + $0x18] sm:$0xff] %v650
        %667 = vst [vmem:[%s339 + $0x20] sm:$0xff] %v651
        %668 = vst [vmem:[%s339 + $0x28] sm:$0xff] %v652
        %669 = vst [vmem:[%s339 + $0x30] sm:$0xff] %v653
        %670 = vst [vmem:[%s339 + $0x38] sm:$0xff] %v654
        %671 = vst [vmem:[%s339 + $0x40] sm:$0xff] %v655
        %672 = vst [vmem:[%s339 + $0x48] sm:$0xff] %v656
        %673 = vst [vmem:[%s339 + $0x50] sm:$0xff] %v657
        %674 = vst [vmem:[%s339 + $0x58] sm:$0xff] %v658
        %675 = vst [vmem:[%s339 + $0x60] sm:$0xff] %v659
        %676 = vst [vmem:[%s339 + $0x68] sm:$0xff] %v660
        %677 = vst [vmem:[%s339 + $0x70] sm:$0xff] %v661
        %678 = vst [vmem:[%s339 + $0x78] sm:$0xff] %v662
      $region40: #{correlation_forward.1} parent=35 // pred_fallthru
        _
      %p679 = scmp.ne.s32.totalorder %s21, %s22
      // Predicated region
      $region41: #{correlation_forward.1} parent=35 // pred_check
        %p680 = pneg %p679
      $region42: #{correlation_forward.1} parent=35 // pred_check_branch
        %682 = sbr.rel (%p680) target = $region44
      $region43: #{correlation_forward.1} parent=35 // pred_region
        %683 = vst [vmem:[%s339] sm:$0xff] %v592
        %684 = vst [vmem:[%s339 + $0x8] sm:$0xff] %v593
        %685 = vst [vmem:[%s339 + $0x10] sm:$0xff] %v594
        %686 = vst [vmem:[%s339 + $0x18] sm:$0xff] %v595
        %687 = vst [vmem:[%s339 + $0x20] sm:$0xff] %v596
        %688 = vst [vmem:[%s339 + $0x28] sm:$0xff] %v597
        %689 = vst [vmem:[%s339 + $0x30] sm:$0xff] %v598
        %690 = vst [vmem:[%s339 + $0x38] sm:$0xff] %v599
        %691 = vst [vmem:[%s339 + $0x40] sm:$0xff] %v600
        %692 = vst [vmem:[%s339 + $0x48] sm:$0xff] %v601
        %693 = vst [vmem:[%s339 + $0x50] sm:$0xff] %v602
        %694 = vst [vmem:[%s339 + $0x58] sm:$0xff] %v603
        %695 = vst [vmem:[%s339 + $0x60] sm:$0xff] %v604
        %696 = vst [vmem:[%s339 + $0x68] sm:$0xff] %v605
        %697 = vst [vmem:[%s339 + $0x70] sm:$0xff] %v606
        %698 = vst [vmem:[%s339 + $0x78] sm:$0xff] %v607
      $region44: #{correlation_forward.1} parent=35 // pred_fallthru
        _
      %s699 = smul.u32 16, %s21
      %p700 = scmp.lt.s32.totalorder %s20, 1
      %s701 = scalar_select %p700, %s20, 1
      %p702 = scmp.lt.s32.totalorder %s699, 15
      %s703 = scalar_select %p702, %s699, 15
      %p704 = scmp.lt.s32.totalorder %s22, 0
      %s705 = scalar_select %p704, %s22, 0
      %s706 = sadd.s32 %s705, %s703
      %s707 = smul.addr %s701, 16
      %s708 = sadd.s32 %s706, %s707
      %s709 = smul.addr %s708, 8
      %s710 = scalar_lea.vmem %s4, %s709
      // Predicated region
      $region45: #{correlation_forward.1} parent=35 // pred_check
        %p711 = pneg %p168
      $region46: #{correlation_forward.1} parent=35 // pred_check_branch
        %713 = sbr.rel (%p711) target = $region48
      $region47: #{correlation_forward.1} parent=35 // pred_region
        %s714 = smul.u32 16, %s21
      $region48: #{correlation_forward.1} parent=35 // pred_fallthru
        _
    $region36: #{correlation_forward.1} parent=5 // pred_fallthru
      _
    %p715 = scmp.le.s32.totalorder 2, %s10
    // Predicated region
    $region49: #{correlation_forward.1} parent=5 // pred_check
      %p716 = pneg %p715
    $region50: #{correlation_forward.1} parent=5 // pred_check_branch
      %718 = sbr.rel (%p716) target = $region52
    $region51: #{correlation_forward.1} parent=5 // pred_region
      %s719 = ssub.s32 %s10, 2
      // Predicated region
      $region53: #{correlation_forward.1} parent=51 // pred_check
        %p720 = pneg %p174
      $region54: #{correlation_forward.1} parent=51 // pred_check_branch
        %722 = sbr.rel (%p720) target = $region56
      $region55: #{correlation_forward.1} parent=51 // pred_region
        %s723 = smul.u32 16, %s24
        %p724 = scmp.lt.s32.totalorder %s23, 1
        %s725 = scalar_select %p724, %s23, 1
        %p726 = scmp.lt.s32.totalorder %s723, 15
        %s727 = scalar_select %p726, %s723, 15
        %p728 = scmp.lt.s32.totalorder %s25, 0
        %s729 = scalar_select %p728, %s25, 0
        %s730 = sadd.s32 %s729, %s727
        %s731 = smul.addr %s725, 16
        %s732 = sadd.s32 %s730, %s731
        %s733 = smul.addr %s732, 8
        %s734 = scalar_lea.vmem %s4, %s733
      $region56: #{correlation_forward.1} parent=51 // pred_fallthru
        _
    $region52: #{correlation_forward.1} parent=5 // pred_fallthru
      _
  $region6: #{correlation_forward.1} parent=0 // loop_footer
    %s14 = sadd.s32 1, %s10
  $region7: #{correlation_forward.1} parent=0 // loop_footer_branch
    %9 = sbr.rel target = $region3
  $region8: #{correlation_forward.1} parent=0 // loop_exit
    _

</llo_original>
